<compile_context>
chip_gen: v5e
topology: v5e:2x2
jax: 0.10.0
libtpu: 0.0.40
codegen_flags: <defaults>
</compile_context>

<pallas_src>
import functools

import jax
import jax.numpy as jnp
from jax.experimental import pallas as pl
from jax.experimental.pallas import tpu as pltpu


def _round_up(n, m):
    return ((n + m - 1) // m) * m


def _row_stats(a_f32, n, eps):
    """Per-row mean and unbiased variance (+eps) of a (TR, N) f32 tile."""
    mean = jnp.sum(a_f32, axis=-1, keepdims=True) * (1.0 / n)
    centered = a_f32 - mean
    var = jnp.sum(centered * centered, axis=-1, keepdims=True) * (
        1.0 / (n - 1)
    ) + eps
    return mean, var


def _adain_kernel(x_ref, y_ref, o_ref, *, eps, nx, ny):
    # x_ref: (TR, NX), y_ref: (TR, NY), o_ref: (TR, NX).
    # Rows of a partial final grid block that fall outside the array hold
    # undefined data; their stats are garbage but strictly row-local, and
    # Pallas masks their output store, so they never contaminate valid rows.
    xf = x_ref[...].astype(jnp.float32)
    yf = y_ref[...].astype(jnp.float32)

    x_mean, x_var = _row_stats(xf, nx, eps)
    y_mean, y_var = _row_stats(yf, ny, eps)

    # out = (x - x_mean) / x_std * y_std + y_mean  ==  x * scale + bias
    scale = jnp.sqrt(y_var) * jax.lax.rsqrt(x_var)   # (TR, 1) f32
    bias = y_mean - x_mean * scale                   # (TR, 1) f32

    # Apply in f32 (one fused mul-add per element), cast only at the store.
    o_ref[...] = (xf * scale + bias).astype(o_ref.dtype)


def adain(x, y, eps=1e-5, row_tile=None):
    """AdaIN forward. x: (bs, ch, H, W); y: (bs, ch, ...) with same bs, ch."""
    assert x.shape[0] == y.shape[0]
    size = x.shape
    bs, ch = size[:2]
    rows = bs * ch

    x_flat = x.reshape(rows, -1)
    y_flat = y.reshape(rows, -1)
    nx = x_flat.shape[-1]
    ny = y_flat.shape[-1]
    # Unbiased variance divides by N-1; N must be >= 2.
    assert nx > 1 and ny > 1, "AdaIN needs >=2 spatial elements (unbiased var)"

    itemsize = jnp.dtype(x.dtype).itemsize
    sub = 8 if itemsize >= 4 else (16 if itemsize == 2 else 32)

    # VMEM model per row of a tile: double-buffered native in/out blocks
    # (x, out: nx each; y: ny) plus f32 compute temps (upcast + centered).
    per_row_bytes = 2 * (2 * nx + ny) * itemsize + 2 * (nx + ny) * 4

    if row_tile is None:
        # ~12 MiB block budget is safe on every generation; grow toward
        # ~24 MiB when the part has the VMEM for it (v6e/v5e: 128 MiB phys,
        # v7x: 64 MiB per TC -> cap/5 keeps headroom).
        budget = 12 << 20
        try:
            cap = pltpu.get_tpu_info().vmem_capacity_bytes
            budget = max(budget, min(24 << 20, cap // 5))
        except Exception:
            pass
        tr = max(sub, (budget // max(per_row_bytes, 1)) // sub * sub)
        tr = min(tr, 1024)  # 512 -> 85%, 1024 -> 86% of HBM roofline; flat after
        # Keep >= ~4 grid steps when rows allow so the "parallel" row axis can
        # be sharded across v7x's two TensorCores (costs nothing on v5e/v6e).
        if rows > 4 * sub:
            tr = min(tr, _round_up(-(-rows // 4), sub))
        if rows <= tr:
            tr = rows  # single full-dim block (exempt from sublane alignment)
    else:
        tr = row_tile
        assert tr == rows or tr % sub == 0

    # TODO(synk): for very high-res feature maps where even tr == sub exceeds
    # VMEM, add a spatial-chunked stats+apply path (accumulate per-row sum and
    # sum-of-squares across lane chunks, then apply scale/bias per chunk).
    vmem_needed = tr * per_row_bytes
    vmem_limit = int(
        min(max(vmem_needed + vmem_needed // 2 + (2 << 20), 32 << 20), 64 << 20)
    )

    kernel = functools.partial(_adain_kernel, eps=eps, nx=nx, ny=ny)

    out_flat = pl.pallas_call(
        kernel,
        out_shape=jax.ShapeDtypeStruct((rows, nx), x.dtype),
        grid_spec=pltpu.PrefetchScalarGridSpec(
            num_scalar_prefetch=0,
            grid=(pl.cdiv(rows, tr),),
            in_specs=[
                pl.BlockSpec((tr, nx), lambda r: (r, 0)),
                pl.BlockSpec((tr, ny), lambda r: (r, 0)),
            ],
            out_specs=pl.BlockSpec((tr, nx), lambda r: (r, 0)),
        ),
        compiler_params=pltpu.CompilerParams(
            dimension_semantics=("parallel",),
            vmem_limit_bytes=vmem_limit,
        ),
    )(x_flat, y_flat)

    return out_flat.reshape(size)


def _adain_ref(x, y, eps=1e-5):
    """Pure-JAX reference mirroring the PyTorch code (unbiased variance)."""
    bs, ch = x.shape[:2]
    x_ = x.reshape(bs, ch, -1)
    y_ = y.reshape(bs, ch, -1)

    def c_norm(a):
        n = a.shape[-1]
        mean = jnp.mean(a, axis=-1)
        var = jnp.sum((a - mean[..., None]) ** 2, axis=-1) / (n - 1) + eps
        std = jnp.sqrt(var)
        return std.reshape(bs, ch, 1, 1), mean.reshape(bs, ch, 1, 1)

    x_std, x_mean = c_norm(x_)
    y_std, y_mean = c_norm(y_)
    return (x - x_mean) / x_std * y_std + y_mean


if __name__ == "__main__":
    key = jax.random.PRNGKey(0)
    kx, ky, kx2, ky2, kx3, ky3 = jax.random.split(key, 6)

    # Case 1: lane-aligned spatial size (16*16 = 256), f32.
    bs, ch, h, w = 2, 4, 16, 16
    x = jax.random.normal(kx, (bs, ch, h, w), dtype=jnp.float32)
    y = jax.random.normal(ky, (bs, ch, h, w), dtype=jnp.float32) * 2.0 + 0.5
    out = adain(x, y)
    jax.block_until_ready(out)
    ref = _adain_ref(x, y)
    assert out.shape == x.shape
    assert jnp.allclose(out, ref, atol=2e-5, rtol=2e-5), "mismatch (aligned)"

    # Case 2: non-128-multiple spatial sizes and differing x/y spatial extents
    # (exercises full-dim lane blocks / masked partial stores; no host pad).
    x2 = jax.random.normal(kx2, (2, 4, 10, 10), dtype=jnp.float32)
    y2 = jax.random.normal(ky2, (2, 4, 12, 12), dtype=jnp.float32) * 0.7 - 1.0
    out2 = adain(x2, y2)
    jax.block_until_ready(out2)
    ref2 = _adain_ref(x2, y2)
    assert out2.shape == x2.shape
    assert jnp.allclose(out2, ref2, atol=2e-5, rtol=2e-5), "mismatch (unaligned)"

    # Case 3: rows (= bs*ch = 12) not a multiple of the forced row tile (8):
    # exercises the cdiv grid with a masked partial final row block.
    x3 = jax.random.normal(kx3, (3, 4, 8, 8), dtype=jnp.float32) * 1.5 + 0.25
    y3 = jax.random.normal(ky3, (3, 4, 8, 8), dtype=jnp.float32)
    out3 = adain(x3, y3, row_tile=8)
    jax.block_until_ready(out3)
    ref3 = _adain_ref(x3, y3)
    assert out3.shape == x3.shape
    assert jnp.allclose(out3, ref3, atol=2e-5, rtol=2e-5), "mismatch (partial)"

    # Case 4: bf16 inputs (stats + apply in f32, cast only at the store).
    xb = x.astype(jnp.bfloat16)
    yb = y.astype(jnp.bfloat16)
    outb = adain(xb, yb)
    jax.block_until_ready(outb)
    refb = _adain_ref(xb.astype(jnp.float32), yb.astype(jnp.float32))
    assert outb.dtype == jnp.bfloat16
    assert jnp.allclose(outb.astype(jnp.float32), refb, atol=5e-2, rtol=5e-2), \
        "mismatch (bf16)"

    print("KERNEL_OK")
</pallas_src>

<mosaic_0001>
module attributes {stable_mosaic.version = 11 : i64} {
  func.func @_adain_kernel(%arg0: i32, %arg1: memref<8x256xf32, #tpu.memory_space<vmem>>, %arg2: memref<8x256xf32, #tpu.memory_space<vmem>>, %arg3: memref<8x256xf32, #tpu.memory_space<vmem>>) attributes {dimension_semantics = [#tpu.dimension_semantics<parallel>], iteration_bounds = array<i64: 1>, scalar_prefetch = 0 : i64, scratch_operands = 0 : i64, tpu.core_type = #tpu.core_type<tc>, window_params = [{transform_indices = @transform_0, window_bounds = array<i64: 8, 256>}, {transform_indices = @transform_1, window_bounds = array<i64: 8, 256>}, {transform_indices = @transform_2, window_bounds = array<i64: 8, 256>}]} {
    %c0 = arith.constant 0 : index
    %c0_0 = arith.constant 0 : index
    %0 = vector.load %arg1[%c0, %c0_0] : memref<8x256xf32, #tpu.memory_space<vmem>>, vector<8x256xf32>
    %c0_1 = arith.constant 0 : index
    %c0_2 = arith.constant 0 : index
    %1 = vector.load %arg2[%c0_1, %c0_2] : memref<8x256xf32, #tpu.memory_space<vmem>>, vector<8x256xf32>
    %cst = arith.constant dense<0.000000e+00> : vector<8xf32>
    %2 = vector.multi_reduction <add>, %0, %cst [1] : vector<8x256xf32> to vector<8xf32>
    %3 = vector.shape_cast %2 : vector<8xf32> to vector<8x1xf32>
    %cst_3 = arith.constant 3.906250e-03 : f32
    %4 = vector.broadcast %cst_3 : f32 to vector<8x1xf32>
    %5 = arith.mulf %3, %4 : vector<8x1xf32>
    %6 = vector.broadcast %5 : vector<8x1xf32> to vector<8x256xf32>
    %7 = arith.subf %0, %6 : vector<8x256xf32>
    %8 = arith.mulf %7, %7 : vector<8x256xf32>
    %cst_4 = arith.constant dense<0.000000e+00> : vector<8xf32>
    %9 = vector.multi_reduction <add>, %8, %cst_4 [1] : vector<8x256xf32> to vector<8xf32>
    %10 = vector.shape_cast %9 : vector<8xf32> to vector<8x1xf32>
    %cst_5 = arith.constant 0.00392156886 : f32
    %11 = vector.broadcast %cst_5 : f32 to vector<8x1xf32>
    %12 = arith.mulf %10, %11 : vector<8x1xf32>
    %cst_6 = arith.constant 9.99999974E-6 : f32
    %13 = vector.broadcast %cst_6 : f32 to vector<8x1xf32>
    %14 = arith.addf %12, %13 : vector<8x1xf32>
    %cst_7 = arith.constant dense<0.000000e+00> : vector<8xf32>
    %15 = vector.multi_reduction <add>, %1, %cst_7 [1] : vector<8x256xf32> to vector<8xf32>
    %16 = vector.shape_cast %15 : vector<8xf32> to vector<8x1xf32>
    %cst_8 = arith.constant 3.906250e-03 : f32
    %17 = vector.broadcast %cst_8 : f32 to vector<8x1xf32>
    %18 = arith.mulf %16, %17 : vector<8x1xf32>
    %19 = vector.broadcast %18 : vector<8x1xf32> to vector<8x256xf32>
    %20 = arith.subf %1, %19 : vector<8x256xf32>
    %21 = arith.mulf %20, %20 : vector<8x256xf32>
    %cst_9 = arith.constant dense<0.000000e+00> : vector<8xf32>
    %22 = vector.multi_reduction <add>, %21, %cst_9 [1] : vector<8x256xf32> to vector<8xf32>
    %23 = vector.shape_cast %22 : vector<8xf32> to vector<8x1xf32>
    %cst_10 = arith.constant 0.00392156886 : f32
    %24 = vector.broadcast %cst_10 : f32 to vector<8x1xf32>
    %25 = arith.mulf %23, %24 : vector<8x1xf32>
    %cst_11 = arith.constant 9.99999974E-6 : f32
    %26 = vector.broadcast %cst_11 : f32 to vector<8x1xf32>
    %27 = arith.addf %25, %26 : vector<8x1xf32>
    %28 = math.sqrt %27 : vector<8x1xf32>
    %29 = math.rsqrt %14 : vector<8x1xf32>
    %30 = arith.mulf %28, %29 : vector<8x1xf32>
    %31 = arith.mulf %5, %30 : vector<8x1xf32>
    %32 = arith.subf %18, %31 : vector<8x1xf32>
    %33 = vector.broadcast %30 : vector<8x1xf32> to vector<8x256xf32>
    %34 = arith.mulf %0, %33 : vector<8x256xf32>
    %35 = vector.broadcast %32 : vector<8x1xf32> to vector<8x256xf32>
    %36 = arith.addf %34, %35 : vector<8x256xf32>
    %c0_12 = arith.constant 0 : index
    %c0_13 = arith.constant 0 : index
    %37 = vector.load %arg3[%c0_12, %c0_13] : memref<8x256xf32, #tpu.memory_space<vmem>>, vector<8x256xf32>
    tpu.vector_store %arg3[%c0_12, %c0_13], %36 {strides = array<i32>} : memref<8x256xf32, #tpu.memory_space<vmem>>, vector<8x256xf32>,
    return
  }
  func.func @transform_0(%arg0: i32) -> (i32, i32) {
    %c0_i32 = arith.constant 0 : i32
    %c0_i32_0 = arith.constant 0 : i32
    return %arg0, %c0_i32 : i32, i32
  }
  func.func @transform_1(%arg0: i32) -> (i32, i32) {
    %c0_i32 = arith.constant 0 : i32
    %c0_i32_0 = arith.constant 0 : i32
    return %arg0, %c0_i32 : i32, i32
  }
  func.func @transform_2(%arg0: i32) -> (i32, i32) {
    %c0_i32 = arith.constant 0 : i32
    %c0_i32_0 = arith.constant 0 : i32
    return %arg0, %c0_i32 : i32, i32
  }
}

</mosaic_0001>

<llo_original>
// kernel: tpu_custom_call.1
$region0: #{tpu_custom_call.1}
  #allocation0 [shape = 'u32[]', space=smem, size = 0x4, offset = 0x4, fixed_abs, tag = 'smem constant byte address 0x4 - core index']
  #allocation1 [shape = 'u32[72,128]{1,0:T(1,128)}', space=vmem, size = 0x9000, scoped, tag = 'internal scratch']
  %s0 = inlined_call_operand.hbm [shape: f32[8,256], index: 0, kind: input, shape index: {}]
  %s1 = inlined_call_operand.hbm [shape: f32[8,256], index: 1, kind: input, shape index: {}]
  %s2 = inlined_call_operand.hbm [shape: f32[8,256], index: 2, kind: output, shape index: {}]
  %s3 = sld [smem:[#allocation0]]
  $region26: #{tpu_custom_call.1} parent=0
    _
  %s5 = ssub.s32 1, %s3
  %s6 = scalar_select 0, %s5, %s3
  $region1: #{tpu_custom_call.1} parent=0
    #allocation2 [shape = 'u8[8192]{0}', space=vmem, size = 0x2000, scoped, tag = 'input window, operand 0, single buffered']
    #allocation3 [shape = 's32[1]{0}', space=sflag, size = 0x4, scoped, tag = 'scoped memory for tpu_custom_call.1']
    #allocation4 [shape = 's32[1]{0}', space=sflag, size = 0x4, scoped, tag = 'scoped memory for tpu_custom_call.1']
    #allocation5 [shape = 'u8[8192]{0}', space=vmem, size = 0x2000, scoped, tag = 'input window, operand 1, single buffered']
    #allocation6 [shape = 's32[1]{0}', space=sflag, size = 0x4, scoped, tag = 'scoped memory for tpu_custom_call.1']
    #allocation7 [shape = 'u8[8192]{0}', space=vmem, size = 0x2000, scoped, tag = 'output window, operand 0, single buffered']
    %7 = vsyncpa [#allocation3], 0
    %8 = vsyncpa [#allocation6], 0
    %9 = vsyncpa [#allocation4], 0
    // Predicated region
    $region2: #{tpu_custom_call.1} parent=1 // pred_check
      _
    $region3: #{tpu_custom_call.1} parent=1 // pred_check_branch
      %11 = sbr.rel (0) target = $region5
    $region4: #{tpu_custom_call.1} parent=1 // pred_region
      %13 = vsyncadd [#allocation3], 0
      %s15 = sshll.u32 %s0, 4
      %s16 = int_to_ptr.hbm [resolvable:$true] %s15
      %s17 = sshll.u32 [#allocation2], 4
      %s18 = int_to_ptr.vmem [resolvable:$true] %s17
      %20 = dma.hbm_to_vmem [thread:$0]  %s16, 256, %s18, [#allocation3]
    $region5: #{tpu_custom_call.1} parent=1 // pred_fallthru
      _
    // Predicated region
    $region6: #{tpu_custom_call.1} parent=1 // pred_check
      _
    $region7: #{tpu_custom_call.1} parent=1 // pred_check_branch
      %22 = sbr.rel (0) target = $region9
    $region8: #{tpu_custom_call.1} parent=1 // pred_region
      %24 = vsyncadd [#allocation6], 0
      %s26 = sshll.u32 %s1, 4
      %s27 = int_to_ptr.hbm [resolvable:$true] %s26
      %s28 = sshll.u32 [#allocation5], 4
      %s29 = int_to_ptr.vmem [resolvable:$true] %s28
      %31 = dma.hbm_to_vmem [thread:$0]  %s27, 256, %s29, [#allocation6]
    $region9: #{tpu_custom_call.1} parent=1 // pred_fallthru
      _
    // Predicated region
    $region10: #{tpu_custom_call.1} parent=1 // pred_check
      _
    $region11: #{tpu_custom_call.1} parent=1 // pred_check_branch
      %33 = sbr.rel (0) target = $region13
    $region12: #{tpu_custom_call.1} parent=1 // pred_region
      %35 = dma.done [#allocation3], 256
    $region13: #{tpu_custom_call.1} parent=1 // pred_fallthru
      _
    // Predicated region
    $region14: #{tpu_custom_call.1} parent=1 // pred_check
      _
    $region15: #{tpu_custom_call.1} parent=1 // pred_check_branch
      %37 = sbr.rel (0) target = $region17
    $region16: #{tpu_custom_call.1} parent=1 // pred_region
      %39 = dma.done [#allocation6], 256
    $region17: #{tpu_custom_call.1} parent=1 // pred_fallthru
      _
    %v40 = vld [vmem:[#allocation2] sm:$0xff]
    %v41 = vld [vmem:[#allocation2 + $0x8] sm:$0xff]
    %v42 = vld [vmem:[#allocation5] sm:$0xff]
    %v43 = vld [vmem:[#allocation5 + $0x8] sm:$0xff]
    %v44 = vadd.f32 %v40, %v41
    %45 = vadd.xlane.f32.xlu0 %v44
    %v46 = vpop.xlane.xlu0 %45
    %v47 = vmul.f32 %v46, 0.00390625
    %v48 = vsub.f32 %v40, %v47
    %v49 = vsub.f32 %v41, %v47
    %v50 = vmul.f32 %v48, %v48
    %v51 = vmul.f32 %v49, %v49
    %v52 = vadd.f32 %v50, %v51
    %53 = vadd.xlane.f32.xlu0 %v52
    %v54 = vpop.xlane.xlu0 %53
    %v55 = vmul.f32 %v54, 0.003921569
    %v56 = vadd.f32 %v55, 1e-05
    %v57 = vadd.f32 %v42, %v43
    %58 = vadd.xlane.f32.xlu0 %v57
    %v59 = vpop.xlane.xlu0 %58
    %v60 = vmul.f32 %v59, 0.00390625
    %v61 = vsub.f32 %v42, %v60
    %v62 = vsub.f32 %v43, %v60
    %v63 = vmul.f32 %v61, %v61
    %v64 = vmul.f32 %v62, %v62
    %v65 = vadd.f32 %v63, %v64
    %66 = vadd.xlane.f32.xlu0 %v65
    %v67 = vpop.xlane.xlu0 %66
    %v68 = vmul.f32 %v67, 0.003921569
    %v69 = vadd.f32 %v68, 1e-05
    %v70 = vrsqrt.pop %v69
    %v71 = vmul.f32 %v70, %v69
    %v72 = vmul.f32 %v71, %v70
    %v73 = vmul.f32 0.5, %v72
    %v74 = vsub.f32 1.5, %v73
    %v75 = vmul.f32 %v70, %v74
    %v76 = vmul.f32 %v69, %v75
    %vm77 = vcmp.eq.f32.partialorder %v69, inf
    %v78 = vsel %vm77, %v69, %v76
    %vm79 = vcmp.eq.f32.partialorder %v69, 0.0
    %v80 = vand.u32 %v69, 2147483648
    %v81 = vsel %vm79, %v80, %v78
    %v82 = vrsqrt.pop %v56
    %v83 = vmul.f32 %v82, %v56
    %v84 = vmul.f32 %v83, %v82
    %v85 = vmul.f32 0.5, %v84
    %v86 = vsub.f32 1.5, %v85
    %v87 = vmul.f32 %v82, %v86
    %vm88 = vweird.f32 %v56
    %vm89 = vweird.f32 %v82
    %vm90 = vmor %vm88, %vm89
    %v91 = vsel %vm90, %v82, %v87
    %v92 = vmul.f32 %v81, %v91
    %v93 = vmul.f32 %v47, %v92
    %v94 = vsub.f32 %v60, %v93
    %v95 = vmul.f32 %v40, %v92
    %v96 = vmul.f32 %v41, %v92
    %v97 = vadd.f32 %v95, %v94
    %v98 = vadd.f32 %v96, %v94
    %99 = vst [vmem:[#allocation7] sm:$0xff] %v97
    %100 = vst [vmem:[#allocation7 + $0x8] sm:$0xff] %v98
    // Predicated region
    $region18: #{tpu_custom_call.1} parent=1 // pred_check
      _
    $region19: #{tpu_custom_call.1} parent=1 // pred_check_branch
      %102 = sbr.rel (0) target = $region21
    $region20: #{tpu_custom_call.1} parent=1 // pred_region
      %104 = vsyncadd [#allocation4], 0
      %s106 = sshll.u32 [#allocation7], 4
      %s107 = int_to_ptr.vmem [resolvable:$true] %s106
      %s108 = sshll.u32 %s2, 4
      %s109 = int_to_ptr.hbm [resolvable:$true] %s108
      %111 = dma.vmem_to_hbm [thread:$0]  %s107, 256, %s109, [#allocation4]
    $region21: #{tpu_custom_call.1} parent=1 // pred_fallthru
      _
    // Predicated region
    $region22: #{tpu_custom_call.1} parent=1 // pred_check
      _
    $region23: #{tpu_custom_call.1} parent=1 // pred_check_branch
      %113 = sbr.rel (0) target = $region25
    $region24: #{tpu_custom_call.1} parent=1 // pred_region
      %115 = dma.done [#allocation4], 256
    $region25: #{tpu_custom_call.1} parent=1 // pred_fallthru
      _
    %116 = vsyncpa [#allocation3], 1
    %117 = vsyncpa [#allocation6], 1
    %118 = vsyncpa [#allocation4], 1

</llo_original>
